<compile_context>
chip_gen: v7x
topology: tpu7x:2x2x1
jax: 0.10.0
libtpu: 0.0.40
codegen_flags: <defaults>
</compile_context>

<pallas_src>
import functools

import jax
import jax.numpy as jnp
from jax.experimental import pallas as pl
from jax.experimental.pallas import tpu as pltpu


_LAYER_DIMS = [(9, 40), (40, 40), (40, 40), (40, 40),
               (40, 40), (40, 40), (40, 40), (40, 2)]


def _mlp_kernel(x_ref,
                w1_ref, b1_ref, w2_ref, b2_ref, w3_ref, b3_ref, w4_ref, b4_ref,
                w5_ref, b5_ref, w6_ref, b6_ref, w7_ref, b7_ref, w8_ref, b8_ref,
                o_ref):
    def dense_relu(h, w_ref, b_ref):
        # bf16 operands on the MXU, f32 accumulation; bias-add + ReLU fused, no round-trip.
        y = jnp.dot(h.astype(jnp.bfloat16), w_ref[...],
                    preferred_element_type=jnp.float32) + b_ref[...]
        return jnp.maximum(y, 0.0)

    h = x_ref[...]
    h = dense_relu(h, w1_ref, b1_ref)   # fc1 + relu
    h = dense_relu(h, w2_ref, b2_ref)   # fc2 + relu
    h = dense_relu(h, w3_ref, b3_ref)   # fc3 + relu
    # dropout1 (p=0.1): identity in eval mode
    h = dense_relu(h, w4_ref, b4_ref)   # fc4 + relu
    # dropout1 (p=0.1): identity in eval mode
    h = dense_relu(h, w5_ref, b5_ref)   # fc5 + relu
    h = dense_relu(h, w6_ref, b6_ref)   # fc6 + relu
    h = dense_relu(h, w7_ref, b7_ref)   # fc7 + relu

    # fc8 + softmax over last dim (2 classes -> sigmoid of logit difference; avoids
    # XLU reductions over a 2-wide lane dim and stays numerically stable).
    logits = jnp.dot(h.astype(jnp.bfloat16), w8_ref[...],
                     preferred_element_type=jnp.float32) + b8_ref[...]
    d = logits[:, 1:2] - logits[:, 0:1]                       # [TB, 1]
    p1 = pl.reciprocal(1.0 + jnp.exp(-d), approx=False)       # sigmoid(d)
    col = jax.lax.broadcasted_iota(jnp.int32, logits.shape, 1)
    o_ref[...] = jnp.where(col == 0, 1.0 - p1, p1)


def _round_up(n, m):
    return ((n + m - 1) // m) * m


def mymodule21_forward(x, params, *, block_batch=256):
    """x: [B, 9] float32; params: dict of w1..w8 stored as [in, out] and b1..b8 as [1, out]."""
    B, F = x.shape
    # Batch tile: multiple of 8 (f32 sublanes), capped so tiny batches don't over-pad.
    tb = min(block_batch, _round_up(max(B, 1), 8))
    b_pad = _round_up(B, tb)
    if b_pad != B:
        x = jnp.pad(x, ((0, b_pad - B), (0, 0)))

    ins = [x]
    for i in range(1, 9):
        ins.append(params[f"w{i}"].astype(jnp.bfloat16))   # bf16 MXU operands
        ins.append(params[f"b{i}"].astype(jnp.float32))    # bias add stays f32

    # Weights/biases: full-array blocks, same block every grid step (VMEM-resident).
    in_specs = [pl.BlockSpec((tb, F), lambda i: (i, 0))]
    for a in ins[1:]:
        in_specs.append(pl.BlockSpec(a.shape, lambda i: (0, 0)))

    out = pl.pallas_call(
        _mlp_kernel,
        out_shape=jax.ShapeDtypeStruct((b_pad, 2), jnp.float32),
        grid=(b_pad // tb,),
        in_specs=in_specs,
        out_specs=pl.BlockSpec((tb, 2), lambda i: (i, 0)),
        compiler_params=pltpu.CompilerParams(
            dimension_semantics=("parallel",),          # megacore sharding on v7x
            vmem_limit_bytes=32 * 1024 * 1024,          # bounded working set (v7x has 64 MiB)
        ),
    )(*ins)
    return out[:B]


def init_params(key):
    """Deterministic xavier-uniform-like init (default init_module branch), bias=0.01."""
    params = {}
    bias_const = 0.01
    for i, (fan_in, fan_out) in enumerate(_LAYER_DIMS, start=1):
        key, sub = jax.random.split(key)
        limit = (6.0 / (fan_in + fan_out)) ** 0.5
        params[f"w{i}"] = jax.random.uniform(
            sub, (fan_in, fan_out), jnp.float32, minval=-limit, maxval=limit)
        params[f"b{i}"] = jnp.full((1, fan_out), bias_const, jnp.float32)
    return params


def _ref_forward(x, params):
    """Pure-JAX reference using the same bf16-operand / f32-accumulate recipe."""
    h = x
    for i in range(1, 8):
        w = params[f"w{i}"].astype(jnp.bfloat16)
        h = jnp.maximum(
            jnp.dot(h.astype(jnp.bfloat16), w, preferred_element_type=jnp.float32)
            + params[f"b{i}"], 0.0)
    w8 = params["w8"].astype(jnp.bfloat16)
    logits = (jnp.dot(h.astype(jnp.bfloat16), w8, preferred_element_type=jnp.float32)
              + params["b8"])
    return jax.nn.softmax(logits, axis=-1)


if __name__ == "__main__":
    key = jax.random.PRNGKey(0)
    pkey, xkey = jax.random.split(key)
    params = init_params(pkey)
    x = jax.random.normal(xkey, (8, 9), jnp.float32)

    fwd = jax.jit(functools.partial(mymodule21_forward, params=params))
    out = jax.block_until_ready(fwd(x))

    ref = _ref_forward(x, params)

    assert out.shape == (8, 2)
    row_sums = jnp.sum(out, axis=-1)
    assert bool(jnp.all(jnp.abs(row_sums - 1.0) < 1e-5))
    assert bool(jnp.all(jnp.isfinite(out)))
    assert bool(jnp.all(jnp.abs(out - ref) < 1e-2))
    print("KERNEL_OK")
</pallas_src>

<mosaic_0001>
module attributes {stable_mosaic.version = 11 : i64} {
  func.func @_mlp_kernel(%arg0: i32, %arg1: memref<8x9xf32, #tpu.memory_space<vmem>>, %arg2: memref<9x40xbf16, #tpu.memory_space<vmem>>, %arg3: memref<1x40xf32, #tpu.memory_space<vmem>>, %arg4: memref<40x40xbf16, #tpu.memory_space<vmem>>, %arg5: memref<1x40xf32, #tpu.memory_space<vmem>>, %arg6: memref<40x40xbf16, #tpu.memory_space<vmem>>, %arg7: memref<1x40xf32, #tpu.memory_space<vmem>>, %arg8: memref<40x40xbf16, #tpu.memory_space<vmem>>, %arg9: memref<1x40xf32, #tpu.memory_space<vmem>>, %arg10: memref<40x40xbf16, #tpu.memory_space<vmem>>, %arg11: memref<1x40xf32, #tpu.memory_space<vmem>>, %arg12: memref<40x40xbf16, #tpu.memory_space<vmem>>, %arg13: memref<1x40xf32, #tpu.memory_space<vmem>>, %arg14: memref<40x40xbf16, #tpu.memory_space<vmem>>, %arg15: memref<1x40xf32, #tpu.memory_space<vmem>>, %arg16: memref<40x2xbf16, #tpu.memory_space<vmem>>, %arg17: memref<1x2xf32, #tpu.memory_space<vmem>>, %arg18: memref<8x2xf32, #tpu.memory_space<vmem>>) attributes {dimension_semantics = [#tpu.dimension_semantics<parallel>], iteration_bounds = array<i64: 1>, scalar_prefetch = 0 : i64, scratch_operands = 0 : i64, tpu.core_type = #tpu.core_type<tc>, window_params = [{transform_indices = @transform_0, window_bounds = array<i64: 8, 9>}, {pipeline_mode = #tpu.pipeline_mode<synchronous>, transform_indices = @transform_1, window_bounds = array<i64: 9, 40>}, {pipeline_mode = #tpu.pipeline_mode<synchronous>, transform_indices = @transform_2, window_bounds = array<i64: 1, 40>}, {pipeline_mode = #tpu.pipeline_mode<synchronous>, transform_indices = @transform_3, window_bounds = array<i64: 40, 40>}, {pipeline_mode = #tpu.pipeline_mode<synchronous>, transform_indices = @transform_4, window_bounds = array<i64: 1, 40>}, {pipeline_mode = #tpu.pipeline_mode<synchronous>, transform_indices = @transform_5, window_bounds = array<i64: 40, 40>}, {pipeline_mode = #tpu.pipeline_mode<synchronous>, transform_indices = @transform_6, window_bounds = array<i64: 1, 40>}, {pipeline_mode = #tpu.pipeline_mode<synchronous>, transform_indices = @transform_7, window_bounds = array<i64: 40, 40>}, {pipeline_mode = #tpu.pipeline_mode<synchronous>, transform_indices = @transform_8, window_bounds = array<i64: 1, 40>}, {pipeline_mode = #tpu.pipeline_mode<synchronous>, transform_indices = @transform_9, window_bounds = array<i64: 40, 40>}, {pipeline_mode = #tpu.pipeline_mode<synchronous>, transform_indices = @transform_10, window_bounds = array<i64: 1, 40>}, {pipeline_mode = #tpu.pipeline_mode<synchronous>, transform_indices = @transform_11, window_bounds = array<i64: 40, 40>}, {pipeline_mode = #tpu.pipeline_mode<synchronous>, transform_indices = @transform_12, window_bounds = array<i64: 1, 40>}, {pipeline_mode = #tpu.pipeline_mode<synchronous>, transform_indices = @transform_13, window_bounds = array<i64: 40, 40>}, {pipeline_mode = #tpu.pipeline_mode<synchronous>, transform_indices = @transform_14, window_bounds = array<i64: 1, 40>}, {pipeline_mode = #tpu.pipeline_mode<synchronous>, transform_indices = @transform_15, window_bounds = array<i64: 40, 2>}, {pipeline_mode = #tpu.pipeline_mode<synchronous>, transform_indices = @transform_16, window_bounds = array<i64: 1, 2>}, {transform_indices = @transform_17, window_bounds = array<i64: 8, 2>}]} {
    %c0 = arith.constant 0 : index
    %c0_0 = arith.constant 0 : index
    %0 = vector.load %arg1[%c0, %c0_0] : memref<8x9xf32, #tpu.memory_space<vmem>>, vector<8x9xf32>
    %1 = arith.truncf %0 : vector<8x9xf32> to vector<8x9xbf16>
    %c0_1 = arith.constant 0 : index
    %c0_2 = arith.constant 0 : index
    %2 = vector.load %arg2[%c0_1, %c0_2] : memref<9x40xbf16, #tpu.memory_space<vmem>>, vector<9x40xbf16>
    %cst = arith.constant dense<0.000000e+00> : vector<8x40xf32>
    %3 = tpu.matmul %1, %2, %cst {dimension_numbers = #tpu.dot_dimension_numbers<[1], [0], [0], [1], [0, 0, 1, 1], [], []>} : vector<8x9xbf16>, vector<9x40xbf16>, vector<8x40xf32> -> vector<8x40xf32>
    %c0_3 = arith.constant 0 : index
    %c0_4 = arith.constant 0 : index
    %4 = vector.load %arg3[%c0_3, %c0_4] : memref<1x40xf32, #tpu.memory_space<vmem>>, vector<1x40xf32>
    %5 = vector.broadcast %4 : vector<1x40xf32> to vector<8x40xf32>
    %6 = arith.addf %3, %5 : vector<8x40xf32>
    %cst_5 = arith.constant 0.000000e+00 : f32
    %7 = vector.broadcast %cst_5 : f32 to vector<8x40xf32>
    %8 = arith.maximumf %6, %7 : vector<8x40xf32>
    %9 = arith.truncf %8 : vector<8x40xf32> to vector<8x40xbf16>
    %c0_6 = arith.constant 0 : index
    %c0_7 = arith.constant 0 : index
    %10 = vector.load %arg4[%c0_6, %c0_7] : memref<40x40xbf16, #tpu.memory_space<vmem>>, vector<40x40xbf16>
    %cst_8 = arith.constant dense<0.000000e+00> : vector<8x40xf32>
    %11 = tpu.matmul %9, %10, %cst_8 {dimension_numbers = #tpu.dot_dimension_numbers<[1], [0], [0], [1], [0, 0, 1, 1], [], []>} : vector<8x40xbf16>, vector<40x40xbf16>, vector<8x40xf32> -> vector<8x40xf32>
    %c0_9 = arith.constant 0 : index
    %c0_10 = arith.constant 0 : index
    %12 = vector.load %arg5[%c0_9, %c0_10] : memref<1x40xf32, #tpu.memory_space<vmem>>, vector<1x40xf32>
    %13 = vector.broadcast %12 : vector<1x40xf32> to vector<8x40xf32>
    %14 = arith.addf %11, %13 : vector<8x40xf32>
    %cst_11 = arith.constant 0.000000e+00 : f32
    %15 = vector.broadcast %cst_11 : f32 to vector<8x40xf32>
    %16 = arith.maximumf %14, %15 : vector<8x40xf32>
    %17 = arith.truncf %16 : vector<8x40xf32> to vector<8x40xbf16>
    %c0_12 = arith.constant 0 : index
    %c0_13 = arith.constant 0 : index
    %18 = vector.load %arg6[%c0_12, %c0_13] : memref<40x40xbf16, #tpu.memory_space<vmem>>, vector<40x40xbf16>
    %cst_14 = arith.constant dense<0.000000e+00> : vector<8x40xf32>
    %19 = tpu.matmul %17, %18, %cst_14 {dimension_numbers = #tpu.dot_dimension_numbers<[1], [0], [0], [1], [0, 0, 1, 1], [], []>} : vector<8x40xbf16>, vector<40x40xbf16>, vector<8x40xf32> -> vector<8x40xf32>
    %c0_15 = arith.constant 0 : index
    %c0_16 = arith.constant 0 : index
    %20 = vector.load %arg7[%c0_15, %c0_16] : memref<1x40xf32, #tpu.memory_space<vmem>>, vector<1x40xf32>
    %21 = vector.broadcast %20 : vector<1x40xf32> to vector<8x40xf32>
    %22 = arith.addf %19, %21 : vector<8x40xf32>
    %cst_17 = arith.constant 0.000000e+00 : f32
    %23 = vector.broadcast %cst_17 : f32 to vector<8x40xf32>
    %24 = arith.maximumf %22, %23 : vector<8x40xf32>
    %25 = arith.truncf %24 : vector<8x40xf32> to vector<8x40xbf16>
    %c0_18 = arith.constant 0 : index
    %c0_19 = arith.constant 0 : index
    %26 = vector.load %arg8[%c0_18, %c0_19] : memref<40x40xbf16, #tpu.memory_space<vmem>>, vector<40x40xbf16>
    %cst_20 = arith.constant dense<0.000000e+00> : vector<8x40xf32>
    %27 = tpu.matmul %25, %26, %cst_20 {dimension_numbers = #tpu.dot_dimension_numbers<[1], [0], [0], [1], [0, 0, 1, 1], [], []>} : vector<8x40xbf16>, vector<40x40xbf16>, vector<8x40xf32> -> vector<8x40xf32>
    %c0_21 = arith.constant 0 : index
    %c0_22 = arith.constant 0 : index
    %28 = vector.load %arg9[%c0_21, %c0_22] : memref<1x40xf32, #tpu.memory_space<vmem>>, vector<1x40xf32>
    %29 = vector.broadcast %28 : vector<1x40xf32> to vector<8x40xf32>
    %30 = arith.addf %27, %29 : vector<8x40xf32>
    %cst_23 = arith.constant 0.000000e+00 : f32
    %31 = vector.broadcast %cst_23 : f32 to vector<8x40xf32>
    %32 = arith.maximumf %30, %31 : vector<8x40xf32>
    %33 = arith.truncf %32 : vector<8x40xf32> to vector<8x40xbf16>
    %c0_24 = arith.constant 0 : index
    %c0_25 = arith.constant 0 : index
    %34 = vector.load %arg10[%c0_24, %c0_25] : memref<40x40xbf16, #tpu.memory_space<vmem>>, vector<40x40xbf16>
    %cst_26 = arith.constant dense<0.000000e+00> : vector<8x40xf32>
    %35 = tpu.matmul %33, %34, %cst_26 {dimension_numbers = #tpu.dot_dimension_numbers<[1], [0], [0], [1], [0, 0, 1, 1], [], []>} : vector<8x40xbf16>, vector<40x40xbf16>, vector<8x40xf32> -> vector<8x40xf32>
    %c0_27 = arith.constant 0 : index
    %c0_28 = arith.constant 0 : index
    %36 = vector.load %arg11[%c0_27, %c0_28] : memref<1x40xf32, #tpu.memory_space<vmem>>, vector<1x40xf32>
    %37 = vector.broadcast %36 : vector<1x40xf32> to vector<8x40xf32>
    %38 = arith.addf %35, %37 : vector<8x40xf32>
    %cst_29 = arith.constant 0.000000e+00 : f32
    %39 = vector.broadcast %cst_29 : f32 to vector<8x40xf32>
    %40 = arith.maximumf %38, %39 : vector<8x40xf32>
    %41 = arith.truncf %40 : vector<8x40xf32> to vector<8x40xbf16>
    %c0_30 = arith.constant 0 : index
    %c0_31 = arith.constant 0 : index
    %42 = vector.load %arg12[%c0_30, %c0_31] : memref<40x40xbf16, #tpu.memory_space<vmem>>, vector<40x40xbf16>
    %cst_32 = arith.constant dense<0.000000e+00> : vector<8x40xf32>
    %43 = tpu.matmul %41, %42, %cst_32 {dimension_numbers = #tpu.dot_dimension_numbers<[1], [0], [0], [1], [0, 0, 1, 1], [], []>} : vector<8x40xbf16>, vector<40x40xbf16>, vector<8x40xf32> -> vector<8x40xf32>
    %c0_33 = arith.constant 0 : index
    %c0_34 = arith.constant 0 : index
    %44 = vector.load %arg13[%c0_33, %c0_34] : memref<1x40xf32, #tpu.memory_space<vmem>>, vector<1x40xf32>
    %45 = vector.broadcast %44 : vector<1x40xf32> to vector<8x40xf32>
    %46 = arith.addf %43, %45 : vector<8x40xf32>
    %cst_35 = arith.constant 0.000000e+00 : f32
    %47 = vector.broadcast %cst_35 : f32 to vector<8x40xf32>
    %48 = arith.maximumf %46, %47 : vector<8x40xf32>
    %49 = arith.truncf %48 : vector<8x40xf32> to vector<8x40xbf16>
    %c0_36 = arith.constant 0 : index
    %c0_37 = arith.constant 0 : index
    %50 = vector.load %arg14[%c0_36, %c0_37] : memref<40x40xbf16, #tpu.memory_space<vmem>>, vector<40x40xbf16>
    %cst_38 = arith.constant dense<0.000000e+00> : vector<8x40xf32>
    %51 = tpu.matmul %49, %50, %cst_38 {dimension_numbers = #tpu.dot_dimension_numbers<[1], [0], [0], [1], [0, 0, 1, 1], [], []>} : vector<8x40xbf16>, vector<40x40xbf16>, vector<8x40xf32> -> vector<8x40xf32>
    %c0_39 = arith.constant 0 : index
    %c0_40 = arith.constant 0 : index
    %52 = vector.load %arg15[%c0_39, %c0_40] : memref<1x40xf32, #tpu.memory_space<vmem>>, vector<1x40xf32>
    %53 = vector.broadcast %52 : vector<1x40xf32> to vector<8x40xf32>
    %54 = arith.addf %51, %53 : vector<8x40xf32>
    %cst_41 = arith.constant 0.000000e+00 : f32
    %55 = vector.broadcast %cst_41 : f32 to vector<8x40xf32>
    %56 = arith.maximumf %54, %55 : vector<8x40xf32>
    %57 = arith.truncf %56 : vector<8x40xf32> to vector<8x40xbf16>
    %c0_42 = arith.constant 0 : index
    %c0_43 = arith.constant 0 : index
    %58 = vector.load %arg16[%c0_42, %c0_43] : memref<40x2xbf16, #tpu.memory_space<vmem>>, vector<40x2xbf16>
    %cst_44 = arith.constant dense<0.000000e+00> : vector<8x2xf32>
    %59 = tpu.matmul %57, %58, %cst_44 {dimension_numbers = #tpu.dot_dimension_numbers<[1], [0], [0], [1], [0, 0, 1, 1], [], []>} : vector<8x40xbf16>, vector<40x2xbf16>, vector<8x2xf32> -> vector<8x2xf32>
    %c0_45 = arith.constant 0 : index
    %c0_46 = arith.constant 0 : index
    %60 = vector.load %arg17[%c0_45, %c0_46] : memref<1x2xf32, #tpu.memory_space<vmem>>, vector<1x2xf32>
    %61 = vector.broadcast %60 : vector<1x2xf32> to vector<8x2xf32>
    %62 = arith.addf %59, %61 : vector<8x2xf32>
    %63 = vector.extract_strided_slice %62 {offsets = [0, 1], sizes = [8, 1], strides = [1, 1]} : vector<8x2xf32> to vector<8x1xf32>
    %64 = vector.extract_strided_slice %62 {offsets = [0, 0], sizes = [8, 1], strides = [1, 1]} : vector<8x2xf32> to vector<8x1xf32>
    %65 = arith.subf %63, %64 : vector<8x1xf32>
    %cst_47 = arith.constant 0.000000e+00 : f32
    %66 = vector.broadcast %cst_47 : f32 to vector<8x1xf32>
    %67 = arith.subf %66, %65 : vector<8x1xf32>
    %68 = math.exp %67 : vector<8x1xf32>
    %cst_48 = arith.constant 1.000000e+00 : f32
    %69 = vector.broadcast %cst_48 : f32 to vector<8x1xf32>
    %70 = arith.addf %69, %68 : vector<8x1xf32>
    %71 = tpu.reciprocal %70 : vector<8x1xf32> -> vector<8x1xf32>
    %72 = tpu.iota {dimensions = array<i32: 1>} : vector<8x2xi32>
    %c0_i32 = arith.constant 0 : i32
    %73 = vector.broadcast %c0_i32 : i32 to vector<8x2xi32>
    %74 = arith.cmpi eq, %72, %73 : vector<8x2xi32>
    %cst_49 = arith.constant 1.000000e+00 : f32
    %75 = vector.broadcast %cst_49 : f32 to vector<8x1xf32>
    %76 = arith.subf %75, %71 : vector<8x1xf32>
    %77 = vector.shape_cast %76 : vector<8x1xf32> to vector<8x1xf32>
    %78 = vector.broadcast %77 : vector<8x1xf32> to vector<8x2xf32>
    %79 = vector.shape_cast %71 : vector<8x1xf32> to vector<8x1xf32>
    %80 = vector.broadcast %79 : vector<8x1xf32> to vector<8x2xf32>
    %81 = arith.select %74, %78, %80 : vector<8x2xi1>, vector<8x2xf32>
    %c0_50 = arith.constant 0 : index
    %c0_51 = arith.constant 0 : index
    %82 = vector.load %arg18[%c0_50, %c0_51] : memref<8x2xf32, #tpu.memory_space<vmem>>, vector<8x2xf32>
    tpu.vector_store %arg18[%c0_50, %c0_51], %81 {strides = array<i32>} : memref<8x2xf32, #tpu.memory_space<vmem>>, vector<8x2xf32>,
    return
  }
  func.func @transform_0(%arg0: i32) -> (i32, i32) {
    %c0_i32 = arith.constant 0 : i32
    %c0_i32_0 = arith.constant 0 : i32
    return %arg0, %c0_i32 : i32, i32
  }
  func.func @transform_1(%arg0: i32) -> (i32, i32) {
    %c0_i32 = arith.constant 0 : i32
    %c0_i32_0 = arith.constant 0 : i32
    %c0_i32_1 = arith.constant 0 : i32
    return %c0_i32, %c0_i32_0 : i32, i32
  }
  func.func @transform_2(%arg0: i32) -> (i32, i32) {
    %c0_i32 = arith.constant 0 : i32
    %c0_i32_0 = arith.constant 0 : i32
    %c0_i32_1 = arith.constant 0 : i32
    return %c0_i32, %c0_i32_0 : i32, i32
  }
  func.func @transform_3(%arg0: i32) -> (i32, i32) {
    %c0_i32 = arith.constant 0 : i32
    %c0_i32_0 = arith.constant 0 : i32
    %c0_i32_1 = arith.constant 0 : i32
    return %c0_i32, %c0_i32_0 : i32, i32
  }
  func.func @transform_4(%arg0: i32) -> (i32, i32) {
    %c0_i32 = arith.constant 0 : i32
    %c0_i32_0 = arith.constant 0 : i32
    %c0_i32_1 = arith.constant 0 : i32
    return %c0_i32, %c0_i32_0 : i32, i32
  }
  func.func @transform_5(%arg0: i32) -> (i32, i32) {
    %c0_i32 = arith.constant 0 : i32
    %c0_i32_0 = arith.constant 0 : i32
    %c0_i32_1 = arith.constant 0 : i32
    return %c0_i32, %c0_i32_0 : i32, i32
  }
  func.func @transform_6(%arg0: i32) -> (i32, i32) {
    %c0_i32 = arith.constant 0 : i32
    %c0_i32_0 = arith.constant 0 : i32
    %c0_i32_1 = arith.constant 0 : i32
    return %c0_i32, %c0_i32_0 : i32, i32
  }
  func.func @transform_7(%arg0: i32) -> (i32, i32) {
    %c0_i32 = arith.constant 0 : i32
    %c0_i32_0 = arith.constant 0 : i32
    %c0_i32_1 = arith.constant 0 : i32
    return %c0_i32, %c0_i32_0 : i32, i32
  }
  func.func @transform_8(%arg0: i32) -> (i32, i32) {
    %c0_i32 = arith.constant 0 : i32
    %c0_i32_0 = arith.constant 0 : i32
    %c0_i32_1 = arith.constant 0 : i32
    return %c0_i32, %c0_i32_0 : i32, i32
  }
  func.func @transform_9(%arg0: i32) -> (i32, i32) {
    %c0_i32 = arith.constant 0 : i32
    %c0_i32_0 = arith.constant 0 : i32
    %c0_i32_1 = arith.constant 0 : i32
    return %c0_i32, %c0_i32_0 : i32, i32
  }
  func.func @transform_10(%arg0: i32) -> (i32, i32) {
    %c0_i32 = arith.constant 0 : i32
    %c0_i32_0 = arith.constant 0 : i32
    %c0_i32_1 = arith.constant 0 : i32
    return %c0_i32, %c0_i32_0 : i32, i32
  }
  func.func @transform_11(%arg0: i32) -> (i32, i32) {
    %c0_i32 = arith.constant 0 : i32
    %c0_i32_0 = arith.constant 0 : i32
    %c0_i32_1 = arith.constant 0 : i32
    return %c0_i32, %c0_i32_0 : i32, i32
  }
  func.func @transform_12(%arg0: i32) -> (i32, i32) {
    %c0_i32 = arith.constant 0 : i32
    %c0_i32_0 = arith.constant 0 : i32
    %c0_i32_1 = arith.constant 0 : i32
    return %c0_i32, %c0_i32_0 : i32, i32
  }
  func.func @transform_13(%arg0: i32) -> (i32, i32) {
    %c0_i32 = arith.constant 0 : i32
    %c0_i32_0 = arith.constant 0 : i32
    %c0_i32_1 = arith.constant 0 : i32
    return %c0_i32, %c0_i32_0 : i32, i32
  }
  func.func @transform_14(%arg0: i32) -> (i32, i32) {
    %c0_i32 = arith.constant 0 : i32
    %c0_i32_0 = arith.constant 0 : i32
    %c0_i32_1 = arith.constant 0 : i32
    return %c0_i32, %c0_i32_0 : i32, i32
  }
  func.func @transform_15(%arg0: i32) -> (i32, i32) {
    %c0_i32 = arith.constant 0 : i32
    %c0_i32_0 = arith.constant 0 : i32
    %c0_i32_1 = arith.constant 0 : i32
    return %c0_i32, %c0_i32_0 : i32, i32
  }
  func.func @transform_16(%arg0: i32) -> (i32, i32) {
    %c0_i32 = arith.constant 0 : i32
    %c0_i32_0 = arith.constant 0 : i32
    %c0_i32_1 = arith.constant 0 : i32
    return %c0_i32, %c0_i32_0 : i32, i32
  }
  func.func @transform_17(%arg0: i32) -> (i32, i32) {
    %c0_i32 = arith.constant 0 : i32
    %c0_i32_0 = arith.constant 0 : i32
    return %arg0, %c0_i32 : i32, i32
  }
}

</mosaic_0001>

<llo_original>
// kernel: mymodule21_forward.1
$region0: #{mymodule21_forward.1}
  #allocation0 [shape = 'u32[]', space=smem, size = 0x4, offset = 0x4, fixed_abs, tag = 'smem constant byte address 0x4 - core index']
  #allocation1 [shape = 'u32[144,128]{1,0:T(1,128)}', space=vmem, size = 0x12000, scoped, tag = 'internal scratch']
  %s0 = inlined_call_operand.hbm [shape: f32[8,9], index: 0, kind: input, shape index: {}]
  %s1 = inlined_call_operand.hbm [shape: bf16[9,40], index: 1, kind: input, shape index: {}]
  %s2 = inlined_call_operand.vmem [shape: f32[1,40], index: 2, kind: input, shape index: {}, may-alias: {2,4,6,8,10,12,14}]
  %s3 = inlined_call_operand.hbm [shape: bf16[40,40], index: 3, kind: input, shape index: {}]
  %s4 = inlined_call_operand.vmem [shape: f32[1,40], index: 4, kind: input, shape index: {}, may-alias: {2,4,6,8,10,12,14}]
  %s5 = inlined_call_operand.hbm [shape: bf16[40,40], index: 5, kind: input, shape index: {}]
  %s6 = inlined_call_operand.vmem [shape: f32[1,40], index: 6, kind: input, shape index: {}, may-alias: {2,4,6,8,10,12,14}]
  %s7 = inlined_call_operand.hbm [shape: bf16[40,40], index: 7, kind: input, shape index: {}]
  %s8 = inlined_call_operand.vmem [shape: f32[1,40], index: 8, kind: input, shape index: {}, may-alias: {2,4,6,8,10,12,14}]
  %s9 = inlined_call_operand.hbm [shape: bf16[40,40], index: 9, kind: input, shape index: {}]
  %s10 = inlined_call_operand.vmem [shape: f32[1,40], index: 10, kind: input, shape index: {}, may-alias: {2,4,6,8,10,12,14}]
  %s11 = inlined_call_operand.hbm [shape: bf16[40,40], index: 11, kind: input, shape index: {}]
  %s12 = inlined_call_operand.vmem [shape: f32[1,40], index: 12, kind: input, shape index: {}, may-alias: {2,4,6,8,10,12,14}]
  %s13 = inlined_call_operand.vmem [shape: bf16[40,40], index: 13, kind: input, shape index: {}]
  %s14 = inlined_call_operand.vmem [shape: f32[1,40], index: 14, kind: input, shape index: {}, may-alias: {2,4,6,8,10,12,14}]
  %s15 = inlined_call_operand.vmem [shape: bf16[40,2], index: 15, kind: input, shape index: {}]
  %s16 = inlined_call_operand.vmem [shape: f32[1,2], index: 16, kind: input, shape index: {}]
  %s17 = inlined_call_operand.vmem [shape: f32[8,2], index: 17, kind: output, shape index: {}]
  %s18 = sld [smem:[#allocation0]]
  $region106: #{mymodule21_forward.1} parent=0
    _
  %s20 = ssub.s32 1, %s18
  %s21 = scalar_select 0, %s20, %s18
  $region1: #{mymodule21_forward.1} parent=0
    #allocation2 [shape = 'u8[4096]{0}', space=vmem, size = 0x1000, scoped, tag = 'input window, operand 0, single buffered']
    #allocation3 [shape = 's32[1]{0}', space=sflag, size = 0x4, scoped, tag = 'scoped memory for mymodule21_forward.1']
    #allocation4 [shape = 'u8[4096]{0}', space=vmem, size = 0x1000, scoped, tag = 'input window, operand 1, single buffered']
    #allocation5 [shape = 's32[1]{0}', space=sflag, size = 0x4, scoped, tag = 'scoped memory for mymodule21_forward.1']
    #allocation6 [shape = 'u8[10240]{0}', space=vmem, size = 0x2800, scoped, tag = 'input window, operand 3, single buffered']
    #allocation7 [shape = 'u8[10240]{0}', space=vmem, size = 0x2800, scoped, tag = 'input window, operand 5, single buffered']
    #allocation8 [shape = 's32[1]{0}', space=sflag, size = 0x4, scoped, tag = 'scoped memory for mymodule21_forward.1']
    #allocation9 [shape = 'u8[10240]{0}', space=vmem, size = 0x2800, scoped, tag = 'input window, operand 7, single buffered']
    #allocation10 [shape = 'u8[10240]{0}', space=vmem, size = 0x2800, scoped, tag = 'input window, operand 9, single buffered']
    #allocation11 [shape = 's32[1]{0}', space=sflag, size = 0x4, scoped, tag = 'scoped memory for mymodule21_forward.1']
    #allocation12 [shape = 'u8[10240]{0}', space=vmem, size = 0x2800, scoped, tag = 'input window, operand 11, single buffered']
    %22 = vsyncpa [#allocation3], 0
    %23 = vsyncpa [#allocation5], 0
    %24 = vsyncpa [#allocation8], 0
    %25 = vsyncpa [#allocation11], 0
    // Predicated region
    $region2: #{mymodule21_forward.1} parent=1 // pred_check
      _
    $region3: #{mymodule21_forward.1} parent=1 // pred_check_branch
      %27 = sbr.rel (0) target = $region5
    $region4: #{mymodule21_forward.1} parent=1 // pred_region
      %s29 = ssub.s32 128, 128
      %30 = vsyncadd [#allocation3], %s29
      %s32 = sshll.u32 [#allocation2], 4
      %s33 = int_to_ptr.vmem [resolvable:$true] %s32
      %35 = dma.hbm_to_vmem [thread:$0]  %s0, 128, %s33, [#allocation3]
    $region5: #{mymodule21_forward.1} parent=1 // pred_fallthru
      _
    // Predicated region
    $region6: #{mymodule21_forward.1} parent=1 // pred_check
      _
    $region7: #{mymodule21_forward.1} parent=1 // pred_check_branch
      %37 = sbr.rel (0) target = $region9
    $region8: #{mymodule21_forward.1} parent=1 // pred_region
      %s39 = ssub.s32 128, 128
      %40 = vsyncadd [#allocation5], %s39
      %s41 = sshll.u32 [#allocation4], 4
      %s42 = int_to_ptr.vmem [resolvable:$true] %s41
      %47 = dma.hbm_to_vmem [thread:$0]  %s1, 128, %s42, [#allocation5], 64, 64, 4
    $region9: #{mymodule21_forward.1} parent=1 // pred_fallthru
      _
    // Predicated region
    $region10: #{mymodule21_forward.1} parent=1 // pred_check
      _
    $region11: #{mymodule21_forward.1} parent=1 // pred_check_branch
      %49 = sbr.rel (0) target = $region13
    $region12: #{mymodule21_forward.1} parent=1 // pred_region
      _
    $region13: #{mymodule21_forward.1} parent=1 // pred_fallthru
      _
    // Predicated region
    $region14: #{mymodule21_forward.1} parent=1 // pred_check
      _
    $region15: #{mymodule21_forward.1} parent=1 // pred_check_branch
      %51 = sbr.rel (0) target = $region17
    $region16: #{mymodule21_forward.1} parent=1 // pred_region
      %s53 = ssub.s32 320, 320
      %54 = vsyncadd [#allocation5], %s53
      %s55 = sshll.u32 [#allocation6], 4
      %s56 = int_to_ptr.vmem [resolvable:$true] %s55
      %61 = dma.hbm_to_vmem [thread:$0]  %s3, 320, %s56, [#allocation5], 64, 64, 4
    $region17: #{mymodule21_forward.1} parent=1 // pred_fallthru
      _
    // Predicated region
    $region18: #{mymodule21_forward.1} parent=1 // pred_check
      _
    $region19: #{mymodule21_forward.1} parent=1 // pred_check_branch
      %63 = sbr.rel (0) target = $region21
    $region20: #{mymodule21_forward.1} parent=1 // pred_region
      _
    $region21: #{mymodule21_forward.1} parent=1 // pred_fallthru
      _
    // Predicated region
    $region22: #{mymodule21_forward.1} parent=1 // pred_check
      _
    $region23: #{mymodule21_forward.1} parent=1 // pred_check_branch
      %65 = sbr.rel (0) target = $region25
    $region24: #{mymodule21_forward.1} parent=1 // pred_region
      %s67 = ssub.s32 320, 320
      %68 = vsyncadd [#allocation8], %s67
      %s69 = sshll.u32 [#allocation7], 4
      %s70 = int_to_ptr.vmem [resolvable:$true] %s69
      %75 = dma.hbm_to_vmem [thread:$0]  %s5, 320, %s70, [#allocation8], 64, 64, 4
    $region25: #{mymodule21_forward.1} parent=1 // pred_fallthru
      _
    // Predicated region
    $region26: #{mymodule21_forward.1} parent=1 // pred_check
      _
    $region27: #{mymodule21_forward.1} parent=1 // pred_check_branch
      %77 = sbr.rel (0) target = $region29
    $region28: #{mymodule21_forward.1} parent=1 // pred_region
      _
    $region29: #{mymodule21_forward.1} parent=1 // pred_fallthru
      _
    // Predicated region
    $region30: #{mymodule21_forward.1} parent=1 // pred_check
      _
    $region31: #{mymodule21_forward.1} parent=1 // pred_check_branch
      %79 = sbr.rel (0) target = $region33
    $region32: #{mymodule21_forward.1} parent=1 // pred_region
      %s81 = ssub.s32 320, 320
      %82 = vsyncadd [#allocation8], %s81
      %s83 = sshll.u32 [#allocation9], 4
      %s84 = int_to_ptr.vmem [resolvable:$true] %s83
      %89 = dma.hbm_to_vmem [thread:$0]  %s7, 320, %s84, [#allocation8], 64, 64, 4
    $region33: #{mymodule21_forward.1} parent=1 // pred_fallthru
      _
    // Predicated region
    $region34: #{mymodule21_forward.1} parent=1 // pred_check
      _
    $region35: #{mymodule21_forward.1} parent=1 // pred_check_branch
      %91 = sbr.rel (0) target = $region37
    $region36: #{mymodule21_forward.1} parent=1 // pred_region
      _
    $region37: #{mymodule21_forward.1} parent=1 // pred_fallthru
      _
    // Predicated region
    $region38: #{mymodule21_forward.1} parent=1 // pred_check
      _
    $region39: #{mymodule21_forward.1} parent=1 // pred_check_branch
      %93 = sbr.rel (0) target = $region41
    $region40: #{mymodule21_forward.1} parent=1 // pred_region
      %s95 = ssub.s32 320, 320
      %96 = vsyncadd [#allocation11], %s95
      %s97 = sshll.u32 [#allocation10], 4
      %s98 = int_to_ptr.vmem [resolvable:$true] %s97
      %103 = dma.hbm_to_vmem [thread:$0]  %s9, 320, %s98, [#allocation11], 64, 64, 4
    $region41: #{mymodule21_forward.1} parent=1 // pred_fallthru
      _
    // Predicated region
    $region42: #{mymodule21_forward.1} parent=1 // pred_check
      _
    $region43: #{mymodule21_forward.1} parent=1 // pred_check_branch
      %105 = sbr.rel (0) target = $region45
    $region44: #{mymodule21_forward.1} parent=1 // pred_region
      _
    $region45: #{mymodule21_forward.1} parent=1 // pred_fallthru
      _
    // Predicated region
    $region46: #{mymodule21_forward.1} parent=1 // pred_check
      _
    $region47: #{mymodule21_forward.1} parent=1 // pred_check_branch
      %107 = sbr.rel (0) target = $region49
    $region48: #{mymodule21_forward.1} parent=1 // pred_region
      %s109 = ssub.s32 320, 320
      %110 = vsyncadd [#allocation11], %s109
      %s111 = sshll.u32 [#allocation12], 4
      %s112 = int_to_ptr.vmem [resolvable:$true] %s111
      %117 = dma.hbm_to_vmem [thread:$0]  %s11, 320, %s112, [#allocation11], 64, 64, 4
    $region49: #{mymodule21_forward.1} parent=1 // pred_fallthru
      _
    // Predicated region
    $region50: #{mymodule21_forward.1} parent=1 // pred_check
      _
    $region51: #{mymodule21_forward.1} parent=1 // pred_check_branch
      %119 = sbr.rel (0) target = $region53
    $region52: #{mymodule21_forward.1} parent=1 // pred_region
      _
    $region53: #{mymodule21_forward.1} parent=1 // pred_fallthru
      _
    // Predicated region
    $region54: #{mymodule21_forward.1} parent=1 // pred_check
      _
    $region55: #{mymodule21_forward.1} parent=1 // pred_check_branch
      %121 = sbr.rel (0) target = $region57
    $region56: #{mymodule21_forward.1} parent=1 // pred_region
      _
    $region57: #{mymodule21_forward.1} parent=1 // pred_fallthru
      _
    // Predicated region
    $region58: #{mymodule21_forward.1} parent=1 // pred_check
      _
    $region59: #{mymodule21_forward.1} parent=1 // pred_check_branch
      %123 = sbr.rel (0) target = $region61
    $region60: #{mymodule21_forward.1} parent=1 // pred_region
      _
    $region61: #{mymodule21_forward.1} parent=1 // pred_fallthru
      _
    // Predicated region
    $region62: #{mymodule21_forward.1} parent=1 // pred_check
      _
    $region63: #{mymodule21_forward.1} parent=1 // pred_check_branch
      %125 = sbr.rel (0) target = $region65
    $region64: #{mymodule21_forward.1} parent=1 // pred_region
      _
    $region65: #{mymodule21_forward.1} parent=1 // pred_fallthru
      _
    // Predicated region
    $region66: #{mymodule21_forward.1} parent=1 // pred_check
      _
    $region67: #{mymodule21_forward.1} parent=1 // pred_check_branch
      %127 = sbr.rel (0) target = $region69
    $region68: #{mymodule21_forward.1} parent=1 // pred_region
      _
    $region69: #{mymodule21_forward.1} parent=1 // pred_fallthru
      _
    // Predicated region
    $region70: #{mymodule21_forward.1} parent=1 // pred_check
      _
    $region71: #{mymodule21_forward.1} parent=1 // pred_check_branch
      %129 = sbr.rel (0) target = $region73
    $region72: #{mymodule21_forward.1} parent=1 // pred_region
      %130 = dma.done [#allocation3], 128
    $region73: #{mymodule21_forward.1} parent=1 // pred_fallthru
      _
    // Predicated region
    $region74: #{mymodule21_forward.1} parent=1 // pred_check
      _
    $region75: #{mymodule21_forward.1} parent=1 // pred_check_branch
      %132 = sbr.rel (0) target = $region77
    $region76: #{mymodule21_forward.1} parent=1 // pred_region
      %133 = dma.done [#allocation5], 128
    $region77: #{mymodule21_forward.1} parent=1 // pred_fallthru
      _
    // Predicated region
    $region78: #{mymodule21_forward.1} parent=1 // pred_check
      _
    $region79: #{mymodule21_forward.1} parent=1 // pred_check_branch
      %135 = sbr.rel (0) target = $region81
    $region80: #{mymodule21_forward.1} parent=1 // pred_region
      %136 = dma.done [#allocation5], 320
    $region81: #{mymodule21_forward.1} parent=1 // pred_fallthru
      _
    // Predicated region
    $region82: #{mymodule21_forward.1} parent=1 // pred_check
      _
    $region83: #{mymodule21_forward.1} parent=1 // pred_check_branch
      %138 = sbr.rel (0) target = $region85
    $region84: #{mymodule21_forward.1} parent=1 // pred_region
      %139 = dma.done [#allocation8], 320
    $region85: #{mymodule21_forward.1} parent=1 // pred_fallthru
      _
    // Predicated region
    $region86: #{mymodule21_forward.1} parent=1 // pred_check
      _
    $region87: #{mymodule21_forward.1} parent=1 // pred_check_branch
      %141 = sbr.rel (0) target = $region89
    $region88: #{mymodule21_forward.1} parent=1 // pred_region
      %142 = dma.done [#allocation8], 320
    $region89: #{mymodule21_forward.1} parent=1 // pred_fallthru
      _
    // Predicated region
    $region90: #{mymodule21_forward.1} parent=1 // pred_check
      _
    $region91: #{mymodule21_forward.1} parent=1 // pred_check_branch
      %144 = sbr.rel (0) target = $region93
    $region92: #{mymodule21_forward.1} parent=1 // pred_region
      %145 = dma.done [#allocation11], 320
    $region93: #{mymodule21_forward.1} parent=1 // pred_fallthru
      _
    // Predicated region
    $region94: #{mymodule21_forward.1} parent=1 // pred_check
      _
    $region95: #{mymodule21_forward.1} parent=1 // pred_check_branch
      %147 = sbr.rel (0) target = $region97
    $region96: #{mymodule21_forward.1} parent=1 // pred_region
      %148 = dma.done [#allocation11], 320
    $region97: #{mymodule21_forward.1} parent=1 // pred_fallthru
      _
    %v150 = vld [vmem:[#allocation2] sm:$0xff]
    %v151 = vpack.c.bf16 %v150, %v150
    %v152 = vld [vmem:[#allocation4] sm:$0xf]
    %v153 = vld [vmem:[#allocation4 + $0x4] sm:$0x1]
    %v154 = vld [vmem:[%s2] sm:$0x1]
    %v156 = vlaneseq
    %v157 = vshrl.u32 %v156, 7
    %v158 = vsub.s32 0, %v157
    %v159 = vrot.slane %v154, %v158
    %v163 = vunpack.c.l.b16 %v152
    %v164 = vunpack.c.l.b16 %v153
    %v165 = vpack.c.b16 %v164, %v163
    %vm166 = vcmask 72704
    %v168 = vsel %vm166, %v151, 0
    %vm170 = vcmask 1043456
    %vm171 = vcmask 1044480
    %v172 = vsel %vm170, 4294967295, 65535
    %v173 = vsel %vm171, %v172, 0
    %v175 = vand.u32 %v165, %v173
    %177 = vmatprep.subr.bf16.mxu0 0
    %178 = vmatpush1.bf16.msra.mxu0 %v175
    %179 = vmatprep.subr.bf16.mxu0 0
    %180 = vmatpush1.bf16.msra.mxu0 0
    %181 = vmatprep.subr.bf16.mxu0 0
    %182 = vmatpush1.bf16.msra.mxu0 0
    %183 = vmatprep.subr.bf16.mxu0 0
    %184 = vmatpush1.bf16.msra.mxu0 0
    %185 = vmatprep.subr.bf16.mxu0 0
    %186 = vmatpush1.bf16.msra.mxu0 0
    %187 = vmatprep.subr.bf16.mxu0 0
    %188 = vmatpush1.bf16.msra.mxu0 0
    %189 = vmatprep.subr.bf16.mxu0 0
    %190 = vmatpush1.bf16.msra.mxu0 0
    %191 = vmatprep.subr.bf16.mxu0 0
    %192 = vmatpush1.bf16.msra.mxu0 0
    %193 = vmatprep.subr.bf16.mxu0 0
    %194 = vmatpush1.bf16.msra.mxu0 0
    %195 = vmatprep.subr.bf16.mxu0 0
    %196 = vmatpush1.bf16.msra.mxu0 0
    %197 = vmatprep.subr.bf16.mxu0 0
    %198 = vmatpush1.bf16.msra.mxu0 0
    %199 = vmatprep.subr.bf16.mxu0 0
    %200 = vmatpush1.bf16.msra.mxu0 0
    %201 = vmatprep.subr.bf16.mxu0 0
    %202 = vmatpush1.bf16.msra.mxu0 0
    %203 = vmatprep.subr.bf16.mxu0 0
    %204 = vmatpush1.bf16.msra.mxu0 0
    %205 = vmatprep.subr.bf16.mxu0 0
    %206 = vmatpush1.bf16.msra.mxu0 0
    %207 = vmatprep.subr.bf16.mxu0 0
    %208 = vmatpush1.bf16.msra.mxu0 0
    %209 = vmatprep.mubr.bf16.mxu0 0
    %210 = vmatmul.mubr.bf16.gmra.mrb[0].mxu0 %v168
    %v211 = vpop.f32.mrb[0].mxu0
    %v212 = vadd.f32 %v159, %v211
    %v213 = vpop.f32.mrb[0].mxu0
    %v214 = vpop.f32.mrb[0].mxu0
    %v215 = vpop.f32.mrb[0].mxu0
    %216 = vdwg.mxu0
    %v217 = vmax.f32 %v212, 0.0
    %v218 = vpack.c.bf16 %v217, %v217
    %v219 = vld [vmem:[#allocation6] sm:$0xf]
    %v220 = vld [vmem:[#allocation6 + $0x4] sm:$0xf]
    %v221 = vld [vmem:[#allocation6 + $0x8] sm:$0xf]
    %v222 = vld [vmem:[#allocation6 + $0xc] sm:$0xf]
    %v223 = vld [vmem:[#allocation6 + $0x10] sm:$0xf]
    %v224 = vld [vmem:[%s4] sm:$0x1]
    %v226 = vlaneseq
    %v227 = vshrl.u32 %v226, 7
    %v228 = vsub.s32 0, %v227
    %v229 = vrot.slane %v224, %v228
    %v236 = vunpack.c.l.b16 %v219
    %v237 = vunpack.c.l.b16 %v220
    %v238 = vunpack.c.l.b16 %v221
    %v239 = vunpack.c.l.b16 %v222
    %v240 = vunpack.c.l.b16 %v223
    %v241 = vpack.c.b16 %v237, %v236
    %v242 = vpack.c.b16 %v239, %v238
    %v243 = vpack.c.b16 %v240, %v240
    %vm246 = vcmask 326656
    %v248 = vsel %vm246, %v218, 0
    %v251 = vsel %vm170, %v243, 0
    %253 = vmatprep.subr.bf16.mxu0 0
    %254 = vmatpush1.bf16.msra.mxu0 %v241
    %255 = vmatprep.subr.bf16.mxu0 0
    %256 = vmatpush1.bf16.msra.mxu0 %v242
    %257 = vmatprep.subr.bf16.mxu0 0
    %258 = vmatpush1.bf16.msra.mxu0 %v251
    %259 = vmatprep.subr.bf16.mxu0 0
    %260 = vmatpush1.bf16.msra.mxu0 0
    %261 = vmatprep.subr.bf16.mxu0 0
    %262 = vmatpush1.bf16.msra.mxu0 0
    %263 = vmatprep.subr.bf16.mxu0 0
    %264 = vmatpush1.bf16.msra.mxu0 0
    %265 = vmatprep.subr.bf16.mxu0 0
    %266 = vmatpush1.bf16.msra.mxu0 0
    %267 = vmatprep.subr.bf16.mxu0 0
    %268 = vmatpush1.bf16.msra.mxu0 0
    %269 = vmatprep.subr.bf16.mxu0 0
    %270 = vmatpush1.bf16.msra.mxu0 0
    %271 = vmatprep.subr.bf16.mxu0 0
    %272 = vmatpush1.bf16.msra.mxu0 0
    %273 = vmatprep.subr.bf16.mxu0 0
    %274 = vmatpush1.bf16.msra.mxu0 0
    %275 = vmatprep.subr.bf16.mxu0 0
    %276 = vmatpush1.bf16.msra.mxu0 0
    %277 = vmatprep.subr.bf16.mxu0 0
    %278 = vmatpush1.bf16.msra.mxu0 0
    %279 = vmatprep.subr.bf16.mxu0 0
    %280 = vmatpush1.bf16.msra.mxu0 0
    %281 = vmatprep.subr.bf16.mxu0 0
    %282 = vmatpush1.bf16.msra.mxu0 0
    %283 = vmatprep.subr.bf16.mxu0 0
    %284 = vmatpush1.bf16.msra.mxu0 0
    %285 = vmatprep.mubr.bf16.mxu0 0
    %286 = vmatmul.mubr.bf16.gmra.mrb[0].mxu0 %v248
    %v287 = vpop.f32.mrb[0].mxu0
    %v288 = vadd.f32 %v229, %v287
    %v289 = vpop.f32.mrb[0].mxu0
    %v290 = vpop.f32.mrb[0].mxu0
    %v291 = vpop.f32.mrb[0].mxu0
    %292 = vdwg.mxu0
    %v293 = vmax.f32 %v288, 0.0
    %v294 = vpack.c.bf16 %v293, %v293
    %v295 = vld [vmem:[#allocation7] sm:$0xf]
    %v296 = vld [vmem:[#allocation7 + $0x4] sm:$0xf]
    %v297 = vld [vmem:[#allocation7 + $0x8] sm:$0xf]
    %v298 = vld [vmem:[#allocation7 + $0xc] sm:$0xf]
    %v299 = vld [vmem:[#allocation7 + $0x10] sm:$0xf]
    %v300 = vld [vmem:[%s6] sm:$0x1]
    %v302 = vlaneseq
    %v303 = vshrl.u32 %v302, 7
    %v304 = vsub.s32 0, %v303
    %v305 = vrot.slane %v300, %v304
    %v312 = vunpack.c.l.b16 %v295
    %v313 = vunpack.c.l.b16 %v296
    %v314 = vunpack.c.l.b16 %v297
    %v315 = vunpack.c.l.b16 %v298
    %v316 = vunpack.c.l.b16 %v299
    %v317 = vpack.c.b16 %v313, %v312
    %v318 = vpack.c.b16 %v315, %v314
    %v319 = vpack.c.b16 %v316, %v316
    %v323 = vsel %vm246, %v294, 0
    %v326 = vsel %vm170, %v319, 0
    %328 = vmatprep.subr.bf16.mxu0 0
    %329 = vmatpush1.bf16.msra.mxu0 %v317
    %330 = vmatprep.subr.bf16.mxu0 0
    %331 = vmatpush1.bf16.msra.mxu0 %v318
    %332 = vmatprep.subr.bf16.mxu0 0
    %333 = vmatpush1.bf16.msra.mxu0 %v326
    %334 = vmatprep.subr.bf16.mxu0 0
    %335 = vmatpush1.bf16.msra.mxu0 0
    %336 = vmatprep.subr.bf16.mxu0 0
    %337 = vmatpush1.bf16.msra.mxu0 0
    %338 = vmatprep.subr.bf16.mxu0 0
    %339 = vmatpush1.bf16.msra.mxu0 0
    %340 = vmatprep.subr.bf16.mxu0 0
    %341 = vmatpush1.bf16.msra.mxu0 0
    %342 = vmatprep.subr.bf16.mxu0 0
    %343 = vmatpush1.bf16.msra.mxu0 0
    %344 = vmatprep.subr.bf16.mxu0 0
    %345 = vmatpush1.bf16.msra.mxu0 0
    %346 = vmatprep.subr.bf16.mxu0 0
    %347 = vmatpush1.bf16.msra.mxu0 0
    %348 = vmatprep.subr.bf16.mxu0 0
    %349 = vmatpush1.bf16.msra.mxu0 0
    %350 = vmatprep.subr.bf16.mxu0 0
    %351 = vmatpush1.bf16.msra.mxu0 0
    %352 = vmatprep.subr.bf16.mxu0 0
    %353 = vmatpush1.bf16.msra.mxu0 0
    %354 = vmatprep.subr.bf16.mxu0 0
    %355 = vmatpush1.bf16.msra.mxu0 0
    %356 = vmatprep.subr.bf16.mxu0 0
    %357 = vmatpush1.bf16.msra.mxu0 0
    %358 = vmatprep.subr.bf16.mxu0 0
    %359 = vmatpush1.bf16.msra.mxu0 0
    %360 = vmatprep.mubr.bf16.mxu0 0
    %361 = vmatmul.mubr.bf16.gmra.mrb[0].mxu0 %v323
    %v362 = vpop.f32.mrb[0].mxu0
    %v363 = vadd.f32 %v305, %v362
    %v364 = vpop.f32.mrb[0].mxu0
    %v365 = vpop.f32.mrb[0].mxu0
    %v366 = vpop.f32.mrb[0].mxu0
    %367 = vdwg.mxu0
    %v368 = vmax.f32 %v363, 0.0
    %v369 = vpack.c.bf16 %v368, %v368
    %v370 = vld [vmem:[#allocation9] sm:$0xf]
    %v371 = vld [vmem:[#allocation9 + $0x4] sm:$0xf]
    %v372 = vld [vmem:[#allocation9 + $0x8] sm:$0xf]
    %v373 = vld [vmem:[#allocation9 + $0xc] sm:$0xf]
    %v374 = vld [vmem:[#allocation9 + $0x10] sm:$0xf]
    %v375 = vld [vmem:[%s8] sm:$0x1]
    %v377 = vlaneseq
    %v378 = vshrl.u32 %v377, 7
    %v379 = vsub.s32 0, %v378
    %v380 = vrot.slane %v375, %v379
    %v387 = vunpack.c.l.b16 %v370
    %v388 = vunpack.c.l.b16 %v371
    %v389 = vunpack.c.l.b16 %v372
    %v390 = vunpack.c.l.b16 %v373
    %v391 = vunpack.c.l.b16 %v374
    %v392 = vpack.c.b16 %v388, %v387
    %v393 = vpack.c.b16 %v390, %v389
    %v394 = vpack.c.b16 %v391, %v391
    %v398 = vsel %vm246, %v369, 0
    %v401 = vsel %vm170, %v394, 0
    %403 = vmatprep.subr.bf16.mxu0 0
    %404 = vmatpush1.bf16.msra.mxu0 %v392
    %405 = vmatprep.subr.bf16.mxu0 0
    %406 = vmatpush1.bf16.msra.mxu0 %v393
    %407 = vmatprep.subr.bf16.mxu0 0
    %408 = vmatpush1.bf16.msra.mxu0 %v401
    %409 = vmatprep.subr.bf16.mxu0 0
    %410 = vmatpush1.bf16.msra.mxu0 0
    %411 = vmatprep.subr.bf16.mxu0 0
    %412 = vmatpush1.bf16.msra.mxu0 0
    %413 = vmatprep.subr.bf16.mxu0 0
    %414 = vmatpush1.bf16.msra.mxu0 0
    %415 = vmatprep.subr.bf16.mxu0 0
    %416 = vmatpush1.bf16.msra.mxu0 0
    %417 = vmatprep.subr.bf16.mxu0 0
    %418 = vmatpush1.bf16.msra.mxu0 0
    %419 = vmatprep.subr.bf16.mxu0 0
    %420 = vmatpush1.bf16.msra.mxu0 0
    %421 = vmatprep.subr.bf16.mxu0 0
    %422 = vmatpush1.bf16.msra.mxu0 0
    %423 = vmatprep.subr.bf16.mxu0 0
    %424 = vmatpush1.bf16.msra.mxu0 0
    %425 = vmatprep.subr.bf16.mxu0 0
    %426 = vmatpush1.bf16.msra.mxu0 0
    %427 = vmatprep.subr.bf16.mxu0 0
    %428 = vmatpush1.bf16.msra.mxu0 0
    %429 = vmatprep.subr.bf16.mxu0 0
    %430 = vmatpush1.bf16.msra.mxu0 0
    %431 = vmatprep.subr.bf16.mxu0 0
    %432 = vmatpush1.bf16.msra.mxu0 0
    %433 = vmatprep.subr.bf16.mxu0 0
    %434 = vmatpush1.bf16.msra.mxu0 0
    %435 = vmatprep.mubr.bf16.mxu0 0
    %436 = vmatmul.mubr.bf16.gmra.mrb[0].mxu0 %v398
    %v437 = vpop.f32.mrb[0].mxu0
    %v438 = vadd.f32 %v380, %v437
    %v439 = vpop.f32.mrb[0].mxu0
    %v440 = vpop.f32.mrb[0].mxu0
    %v441 = vpop.f32.mrb[0].mxu0
    %442 = vdwg.mxu0
    %v443 = vmax.f32 %v438, 0.0
    %v444 = vpack.c.bf16 %v443, %v443
    %v445 = vld [vmem:[#allocation10] sm:$0xf]
    %v446 = vld [vmem:[#allocation10 + $0x4] sm:$0xf]
    %v447 = vld [vmem:[#allocation10 + $0x8] sm:$0xf]
    %v448 = vld [vmem:[#allocation10 + $0xc] sm:$0xf]
    %v449 = vld [vmem:[#allocation10 + $0x10] sm:$0xf]
    %v450 = vld [vmem:[%s10] sm:$0x1]
    %v452 = vlaneseq
    %v453 = vshrl.u32 %v452, 7
    %v454 = vsub.s32 0, %v453
    %v455 = vrot.slane %v450, %v454
    %v462 = vunpack.c.l.b16 %v445
    %v463 = vunpack.c.l.b16 %v446
    %v464 = vunpack.c.l.b16 %v447
    %v465 = vunpack.c.l.b16 %v448
    %v466 = vunpack.c.l.b16 %v449
    %v467 = vpack.c.b16 %v463, %v462
    %v468 = vpack.c.b16 %v465, %v464
    %v469 = vpack.c.b16 %v466, %v466
    %v473 = vsel %vm246, %v444, 0
    %v476 = vsel %vm170, %v469, 0
    %478 = vmatprep.subr.bf16.mxu0 0
    %479 = vmatpush1.bf16.msra.mxu0 %v467
    %480 = vmatprep.subr.bf16.mxu0 0
    %481 = vmatpush1.bf16.msra.mxu0 %v468
    %482 = vmatprep.subr.bf16.mxu0 0
    %483 = vmatpush1.bf16.msra.mxu0 %v476
    %484 = vmatprep.subr.bf16.mxu0 0
    %485 = vmatpush1.bf16.msra.mxu0 0
    %486 = vmatprep.subr.bf16.mxu0 0
    %487 = vmatpush1.bf16.msra.mxu0 0
    %488 = vmatprep.subr.bf16.mxu0 0
    %489 = vmatpush1.bf16.msra.mxu0 0
    %490 = vmatprep.subr.bf16.mxu0 0
    %491 = vmatpush1.bf16.msra.mxu0 0
    %492 = vmatprep.subr.bf16.mxu0 0
    %493 = vmatpush1.bf16.msra.mxu0 0
    %494 = vmatprep.subr.bf16.mxu0 0
    %495 = vmatpush1.bf16.msra.mxu0 0
    %496 = vmatprep.subr.bf16.mxu0 0
    %497 = vmatpush1.bf16.msra.mxu0 0
    %498 = vmatprep.subr.bf16.mxu0 0
    %499 = vmatpush1.bf16.msra.mxu0 0
    %500 = vmatprep.subr.bf16.mxu0 0
    %501 = vmatpush1.bf16.msra.mxu0 0
    %502 = vmatprep.subr.bf16.mxu0 0
    %503 = vmatpush1.bf16.msra.mxu0 0
    %504 = vmatprep.subr.bf16.mxu0 0
    %505 = vmatpush1.bf16.msra.mxu0 0
    %506 = vmatprep.subr.bf16.mxu0 0
    %507 = vmatpush1.bf16.msra.mxu0 0
    %508 = vmatprep.subr.bf16.mxu0 0
    %509 = vmatpush1.bf16.msra.mxu0 0
    %510 = vmatprep.mubr.bf16.mxu0 0
    %511 = vmatmul.mubr.bf16.gmra.mrb[0].mxu0 %v473
    %v512 = vpop.f32.mrb[0].mxu0
    %v513 = vadd.f32 %v455, %v512
    %v514 = vpop.f32.mrb[0].mxu0
    %v515 = vpop.f32.mrb[0].mxu0
    %v516 = vpop.f32.mrb[0].mxu0
    %517 = vdwg.mxu0
    %v518 = vmax.f32 %v513, 0.0
    %v519 = vpack.c.bf16 %v518, %v518
    %v520 = vld [vmem:[#allocation12] sm:$0xf]
    %v521 = vld [vmem:[#allocation12 + $0x4] sm:$0xf]
    %v522 = vld [vmem:[#allocation12 + $0x8] sm:$0xf]
    %v523 = vld [vmem:[#allocation12 + $0xc] sm:$0xf]
    %v524 = vld [vmem:[#allocation12 + $0x10] sm:$0xf]
    %v525 = vld [vmem:[%s12] sm:$0x1]
    %v527 = vlaneseq
    %v528 = vshrl.u32 %v527, 7
    %v529 = vsub.s32 0, %v528
    %v530 = vrot.slane %v525, %v529
    %v537 = vunpack.c.l.b16 %v520
    %v538 = vunpack.c.l.b16 %v521
    %v539 = vunpack.c.l.b16 %v522
    %v540 = vunpack.c.l.b16 %v523
    %v541 = vunpack.c.l.b16 %v524
    %v542 = vpack.c.b16 %v538, %v537
    %v543 = vpack.c.b16 %v540, %v539
    %v544 = vpack.c.b16 %v541, %v541
    %v548 = vsel %vm246, %v519, 0
    %v551 = vsel %vm170, %v544, 0
    %553 = vmatprep.subr.bf16.mxu0 0
    %554 = vmatpush1.bf16.msra.mxu0 %v542
    %555 = vmatprep.subr.bf16.mxu0 0
    %556 = vmatpush1.bf16.msra.mxu0 %v543
    %557 = vmatprep.subr.bf16.mxu0 0
    %558 = vmatpush1.bf16.msra.mxu0 %v551
    %559 = vmatprep.subr.bf16.mxu0 0
    %560 = vmatpush1.bf16.msra.mxu0 0
    %561 = vmatprep.subr.bf16.mxu0 0
    %562 = vmatpush1.bf16.msra.mxu0 0
    %563 = vmatprep.subr.bf16.mxu0 0
    %564 = vmatpush1.bf16.msra.mxu0 0
    %565 = vmatprep.subr.bf16.mxu0 0
    %566 = vmatpush1.bf16.msra.mxu0 0
    %567 = vmatprep.subr.bf16.mxu0 0
    %568 = vmatpush1.bf16.msra.mxu0 0
    %569 = vmatprep.subr.bf16.mxu0 0
    %570 = vmatpush1.bf16.msra.mxu0 0
    %571 = vmatprep.subr.bf16.mxu0 0
    %572 = vmatpush1.bf16.msra.mxu0 0
    %573 = vmatprep.subr.bf16.mxu0 0
    %574 = vmatpush1.bf16.msra.mxu0 0
    %575 = vmatprep.subr.bf16.mxu0 0
    %576 = vmatpush1.bf16.msra.mxu0 0
    %577 = vmatprep.subr.bf16.mxu0 0
    %578 = vmatpush1.bf16.msra.mxu0 0
    %579 = vmatprep.subr.bf16.mxu0 0
    %580 = vmatpush1.bf16.msra.mxu0 0
    %581 = vmatprep.subr.bf16.mxu0 0
    %582 = vmatpush1.bf16.msra.mxu0 0
    %583 = vmatprep.subr.bf16.mxu0 0
    %584 = vmatpush1.bf16.msra.mxu0 0
    %585 = vmatprep.mubr.bf16.mxu0 0
    %586 = vmatmul.mubr.bf16.gmra.mrb[0].mxu0 %v548
    %v587 = vpop.f32.mrb[0].mxu0
    %v588 = vadd.f32 %v530, %v587
    %v589 = vpop.f32.mrb[0].mxu0
    %v590 = vpop.f32.mrb[0].mxu0
    %v591 = vpop.f32.mrb[0].mxu0
    %592 = vdwg.mxu0
    %v593 = vmax.f32 %v588, 0.0
    %v594 = vpack.c.bf16 %v593, %v593
    %v595 = vld [vmem:[%s13] sm:$0xf]
    %v596 = vld [vmem:[%s13 + $0x4] sm:$0xf]
    %v597 = vld [vmem:[%s13 + $0x8] sm:$0xf]
    %v598 = vld [vmem:[%s13 + $0xc] sm:$0xf]
    %v599 = vld [vmem:[%s13 + $0x10] sm:$0xf]
    %v600 = vld [vmem:[%s14] sm:$0x1]
    %v602 = vlaneseq
    %v603 = vshrl.u32 %v602, 7
    %v604 = vsub.s32 0, %v603
    %v605 = vrot.slane %v600, %v604
    %v612 = vunpack.c.l.b16 %v595
    %v613 = vunpack.c.l.b16 %v596
    %v614 = vunpack.c.l.b16 %v597
    %v615 = vunpack.c.l.b16 %v598
    %v616 = vunpack.c.l.b16 %v599
    %v617 = vpack.c.b16 %v613, %v612
    %v618 = vpack.c.b16 %v615, %v614
    %v619 = vpack.c.b16 %v616, %v616
    %v623 = vsel %vm246, %v594, 0
    %v626 = vsel %vm170, %v619, 0
    %628 = vmatprep.subr.bf16.mxu0 0
    %629 = vmatpush1.bf16.msra.mxu0 %v617
    %630 = vmatprep.subr.bf16.mxu0 0
    %631 = vmatpush1.bf16.msra.mxu0 %v618
    %632 = vmatprep.subr.bf16.mxu0 0
    %633 = vmatpush1.bf16.msra.mxu0 %v626
    %634 = vmatprep.subr.bf16.mxu0 0
    %635 = vmatpush1.bf16.msra.mxu0 0
    %636 = vmatprep.subr.bf16.mxu0 0
    %637 = vmatpush1.bf16.msra.mxu0 0
    %638 = vmatprep.subr.bf16.mxu0 0
    %639 = vmatpush1.bf16.msra.mxu0 0
    %640 = vmatprep.subr.bf16.mxu0 0
    %641 = vmatpush1.bf16.msra.mxu0 0
    %642 = vmatprep.subr.bf16.mxu0 0
    %643 = vmatpush1.bf16.msra.mxu0 0
    %644 = vmatprep.subr.bf16.mxu0 0
    %645 = vmatpush1.bf16.msra.mxu0 0
    %646 = vmatprep.subr.bf16.mxu0 0
    %647 = vmatpush1.bf16.msra.mxu0 0
    %648 = vmatprep.subr.bf16.mxu0 0
    %649 = vmatpush1.bf16.msra.mxu0 0
    %650 = vmatprep.subr.bf16.mxu0 0
    %651 = vmatpush1.bf16.msra.mxu0 0
    %652 = vmatprep.subr.bf16.mxu0 0
    %653 = vmatpush1.bf16.msra.mxu0 0
    %654 = vmatprep.subr.bf16.mxu0 0
    %655 = vmatpush1.bf16.msra.mxu0 0
    %656 = vmatprep.subr.bf16.mxu0 0
    %657 = vmatpush1.bf16.msra.mxu0 0
    %658 = vmatprep.subr.bf16.mxu0 0
    %659 = vmatpush1.bf16.msra.mxu0 0
    %660 = vmatprep.mubr.bf16.mxu0 0
    %661 = vmatmul.mubr.bf16.gmra.mrb[0].mxu0 %v623
    %v662 = vpop.f32.mrb[0].mxu0
    %v663 = vadd.f32 %v605, %v662
    %v664 = vpop.f32.mrb[0].mxu0
    %v665 = vpop.f32.mrb[0].mxu0
    %v666 = vpop.f32.mrb[0].mxu0
    %667 = vdwg.mxu0
    %v668 = vmax.f32 %v663, 0.0
    %v669 = vpack.c.bf16 %v668, %v668
    %v670 = vld [vmem:[%s15] sm:$0xf]
    %v671 = vld [vmem:[%s15 + $0x4] sm:$0xf]
    %v672 = vld [vmem:[%s15 + $0x8] sm:$0xf]
    %v673 = vld [vmem:[%s15 + $0xc] sm:$0xf]
    %v674 = vld [vmem:[%s15 + $0x10] sm:$0xf]
    %v675 = vld [vmem:[%s16] sm:$0x1]
    %v677 = vlaneseq
    %v678 = vshrl.u32 %v677, 7
    %v679 = vsub.s32 0, %v678
    %v680 = vrot.slane %v675, %v679
    %v687 = vunpack.c.l.b16 %v670
    %v688 = vunpack.c.l.b16 %v671
    %v689 = vunpack.c.l.b16 %v672
    %v690 = vunpack.c.l.b16 %v673
    %v691 = vunpack.c.l.b16 %v674
    %v692 = vpack.c.b16 %v688, %v687
    %v693 = vpack.c.b16 %v690, %v689
    %v694 = vpack.c.b16 %v691, %v691
    %v698 = vsel %vm246, %v669, 0
    %v701 = vsel %vm170, %v694, 0
    %703 = vmatprep.subr.bf16.mxu0 0
    %704 = vmatpush1.bf16.msra.mxu0 %v692
    %705 = vmatprep.subr.bf16.mxu0 0
    %706 = vmatpush1.bf16.msra.mxu0 %v693
    %707 = vmatprep.subr.bf16.mxu0 0
    %708 = vmatpush1.bf16.msra.mxu0 %v701
    %709 = vmatprep.subr.bf16.mxu0 0
    %710 = vmatpush1.bf16.msra.mxu0 0
    %711 = vmatprep.subr.bf16.mxu0 0
    %712 = vmatpush1.bf16.msra.mxu0 0
    %713 = vmatprep.subr.bf16.mxu0 0
    %714 = vmatpush1.bf16.msra.mxu0 0
    %715 = vmatprep.subr.bf16.mxu0 0
    %716 = vmatpush1.bf16.msra.mxu0 0
    %717 = vmatprep.subr.bf16.mxu0 0
    %718 = vmatpush1.bf16.msra.mxu0 0
    %719 = vmatprep.subr.bf16.mxu0 0
    %720 = vmatpush1.bf16.msra.mxu0 0
    %721 = vmatprep.subr.bf16.mxu0 0
    %722 = vmatpush1.bf16.msra.mxu0 0
    %723 = vmatprep.subr.bf16.mxu0 0
    %724 = vmatpush1.bf16.msra.mxu0 0
    %725 = vmatprep.subr.bf16.mxu0 0
    %726 = vmatpush1.bf16.msra.mxu0 0
    %727 = vmatprep.subr.bf16.mxu0 0
    %728 = vmatpush1.bf16.msra.mxu0 0
    %729 = vmatprep.subr.bf16.mxu0 0
    %730 = vmatpush1.bf16.msra.mxu0 0
    %731 = vmatprep.subr.bf16.mxu0 0
    %732 = vmatpush1.bf16.msra.mxu0 0
    %733 = vmatprep.subr.bf16.mxu0 0
    %734 = vmatpush1.bf16.msra.mxu0 0
    %735 = vmatprep.mubr.bf16.mxu0 0
    %736 = vmatmul.mubr.bf16.gmra.mrb[0].mxu0 %v698
    %v737 = vpop.f32.mrb[0].mxu0
    %v738 = vadd.f32 %v680, %v737
    %v739 = vpop.f32.mrb[0].mxu0
    %v740 = vpop.f32.mrb[0].mxu0
    %v741 = vpop.f32.mrb[0].mxu0
    %742 = vdwg.mxu0
    %744 = vrot.lane.b32.xlu0 %v738, 1
    %v745 = vpop.permute.xlu0 %744
    %v747 = vsub.f32 %v738, %v745
    %v748 = vsub.f32 0.0, %v747
    %v749 = vmul.f32 %v748, 1.442695
    %v750 = vpow.pop %v749
    %v751 = vadd.f32 %v750, 1.0
    %v752 = vrcp.pop %v751
    %v753 = vlaneseq
    %v754 = vand.u32 %v753, 127
    %vm755 = vcmp.eq.s32.totalorder %v754, 0
    %v756 = vsub.f32 1.0, %v752
    %758 = vset.pattern.permute.xlu0 1
    %759 = vperm.xlu0 %758, %v756
    %v760 = vpop.permute.xlu0 %759
    %763 = vset.pattern.permute.xlu0 1
    %764 = vperm.xlu0 %763, %v752
    %v765 = vpop.permute.xlu0 %764
    %v767 = vsel %vm755, %v760, %v765
    %vm768 = vcmask 15360
    %769 = vst.msk [vmem:[%s17] sm:$0xff] %vm768, %v767
    // Predicated region
    $region98: #{mymodule21_forward.1} parent=1 // pred_check
      _
    $region99: #{mymodule21_forward.1} parent=1 // pred_check_branch
      %771 = sbr.rel (0) target = $region101
    $region100: #{mymodule21_forward.1} parent=1 // pred_region
      _
    $region101: #{mymodule21_forward.1} parent=1 // pred_fallthru
      _
    // Predicated region
    $region102: #{mymodule21_forward.1} parent=1 // pred_check
      _
    $region103: #{mymodule21_forward.1} parent=1 // pred_check_branch
      %773 = sbr.rel (0) target = $region105
    $region104: #{mymodule21_forward.1} parent=1 // pred_region
      _
    $region105: #{mymodule21_forward.1} parent=1 // pred_fallthru
      _
    %774 = vsyncpa [#allocation3], 1
    %775 = vsyncpa [#allocation5], 1
    %776 = vsyncpa [#allocation8], 1
    %777 = vsyncpa [#allocation11], 1

</llo_original>
